<compile_context>
chip_gen: v7x
topology: tpu7x:2x2x1
jax: 0.10.0
libtpu: 0.0.40
codegen_flags: <defaults>
</compile_context>

<pallas_src>
import functools

import jax
import jax.numpy as jnp
from jax.experimental import pallas as pl
from jax.experimental.pallas import tpu as pltpu

_LANE = 128
# ~2 MiB per block: >=85% of HBM roofline per measured sweeps, and
# 2 operands x 2 pipeline buffers x 2 MiB = 8 MiB << default scoped VMEM on
# every generation (16 MiB v5e, 32 MiB v6e/v7x).
_TARGET_BLOCK_BYTES = 2 * 1024 * 1024


def _neg_scale_kernel(g_ref, o_ref, *, neg_lambda):
    # o = -lambda * g.  Compute in f32 on the VPU (free under the DMA for a
    # mem-bound streaming kernel), write back in the cotangent/primal dtype.
    g32 = g_ref[...].astype(jnp.float32)
    o_ref[...] = (neg_lambda * g32).astype(o_ref.dtype)


def _layout(n, itemsize):
    """Pick a lane-dense 2-D view (rows, lanes) and a row tile for n elements."""
    padded = ((n + _LANE - 1) // _LANE) * _LANE  # pad only to 128-lane boundary
    lanes = _LANE
    for cand in (8192, 4096, 2048, 1024, 512, 256):
        if padded % cand == 0:
            lanes = cand
            break
    rows = padded // lanes
    row_tile = max(1, _TARGET_BLOCK_BYTES // (lanes * itemsize))
    if row_tile >= rows:
        row_tile = rows                        # whole slab fits in one block
    else:
        row_tile = max(8, (row_tile // 8) * 8)  # keep (8, 128) tile alignment
    return padded, rows, lanes, row_tile


def _neg_scale_pallas(g, lambda_):
    """Stream -lambda_ * g through a Pallas kernel; preserves g.shape/g.dtype."""
    shape, dtype = g.shape, g.dtype
    n = g.size
    itemsize = jnp.dtype(dtype).itemsize
    padded, rows, lanes, row_tile = _layout(n, itemsize)

    flat = g.reshape(-1)
    if padded != n:                # ragged case only: pad to the lane boundary
        flat = jnp.pad(flat, (0, padded - n))
    slab = flat.reshape(rows, lanes)

    kernel = functools.partial(_neg_scale_kernel, neg_lambda=float(-lambda_))
    out = pl.pallas_call(
        kernel,
        out_shape=jax.ShapeDtypeStruct((rows, lanes), dtype),
        grid=(pl.cdiv(rows, row_tile),),
        in_specs=[pl.BlockSpec((row_tile, lanes), lambda i: (i, 0))],
        out_specs=pl.BlockSpec((row_tile, lanes), lambda i: (i, 0)),
        compiler_params=pltpu.CompilerParams(
            dimension_semantics=("parallel",)),  # shards across v7x's 2 TCs
        cost_estimate=pl.CostEstimate(
            flops=n, transcendentals=0, bytes_accessed=2 * n * itemsize),
    )(slab)

    if padded != n:
        out = out.reshape(-1)[:n]
    return out.reshape(shape)


@functools.partial(jax.custom_vjp, nondiff_argnums=(1,))
def grl_wrapper(x, lambda_):
    """GRL forward: exact identity (PyTorch's x.view_as(x)) -- a true no-op."""
    return x


def _grl_fwd(x, lambda_):
    # No residuals needed: the output cotangent already carries shape & dtype.
    return x, None


def _grl_bwd(lambda_, _res, g):
    return (_neg_scale_pallas(g, lambda_),)


grl_wrapper.defvjp(_grl_fwd, _grl_bwd)


class GRLWrapper:
    """Mirror of the PyTorch module: holds lambda_ and applies the GRL."""

    def __init__(self, lambda_):
        self.lambda_ = float(lambda_)

    def __call__(self, x):
        return grl_wrapper(x, self.lambda_)


if __name__ == "__main__":
    key = jax.random.PRNGKey(0)
    # NCHW input, small shapes consistent with a conv-style feature map.
    x = jax.random.normal(key, (2, 4, 16, 16), dtype=jnp.float32)

    module = GRLWrapper(lambda_=0.5)

    # Forward must be an exact identity.
    y = jax.block_until_ready(module(x))
    assert y.shape == x.shape and y.dtype == x.dtype
    assert bool(jnp.array_equal(y, x))

    # Backward path exercises the Pallas -lambda * g kernel.
    grad_x = jax.block_until_ready(jax.grad(lambda a: jnp.sum(module(a)))(x))
    assert bool(jnp.allclose(grad_x, -0.5 * jnp.ones_like(x)))

    # Ragged-size check (numel not a multiple of 128) exercises the pad path.
    x2 = jax.random.normal(jax.random.PRNGKey(1), (3, 5, 7), dtype=jnp.float32)
    grad_x2 = jax.block_until_ready(jax.grad(lambda a: jnp.sum(module(a)))(x2))
    assert bool(jnp.allclose(grad_x2, -0.5 * jnp.ones_like(x2)))

    print("KERNEL_OK")
</pallas_src>

<mosaic_0001>
module attributes {stable_mosaic.version = 11 : i64} {
  func.func @_neg_scale_kernel(%arg0: i32, %arg1: memref<1x2048xf32, #tpu.memory_space<vmem>>, %arg2: memref<1x2048xf32, #tpu.memory_space<vmem>>) attributes {dimension_semantics = [#tpu.dimension_semantics<parallel>], iteration_bounds = array<i64: 1>, scalar_prefetch = 0 : i64, scratch_operands = 0 : i64, tpu.core_type = #tpu.core_type<tc>, window_params = [{transform_indices = @transform_0, window_bounds = array<i64: 1, 2048>}, {transform_indices = @transform_1, window_bounds = array<i64: 1, 2048>}]} {
    %c0 = arith.constant 0 : index
    %c0_0 = arith.constant 0 : index
    %0 = vector.load %arg1[%c0, %c0_0] : memref<1x2048xf32, #tpu.memory_space<vmem>>, vector<1x2048xf32>
    %cst = arith.constant -5.000000e-01 : f32
    %1 = vector.broadcast %cst : f32 to vector<1x2048xf32>
    %2 = arith.mulf %1, %0 : vector<1x2048xf32>
    %c0_1 = arith.constant 0 : index
    %c0_2 = arith.constant 0 : index
    %3 = vector.load %arg2[%c0_1, %c0_2] : memref<1x2048xf32, #tpu.memory_space<vmem>>, vector<1x2048xf32>
    tpu.vector_store %arg2[%c0_1, %c0_2], %2 {strides = array<i32>} : memref<1x2048xf32, #tpu.memory_space<vmem>>, vector<1x2048xf32>,
    return
  }
  func.func @transform_0(%arg0: i32) -> (i32, i32) {
    %c0_i32 = arith.constant 0 : i32
    %c0_i32_0 = arith.constant 0 : i32
    return %arg0, %c0_i32 : i32, i32
  }
  func.func @transform_1(%arg0: i32) -> (i32, i32) {
    %c0_i32 = arith.constant 0 : i32
    %c0_i32_0 = arith.constant 0 : i32
    return %arg0, %c0_i32 : i32, i32
  }
}

</mosaic_0001>

<llo_original>
// kernel: tpu_custom_call.1
$region0: #{tpu_custom_call.1}
  #allocation0 [shape = 'u32[]', space=smem, size = 0x4, offset = 0x4, fixed_abs, tag = 'smem constant byte address 0x4 - core index']
  #allocation1 [shape = 'u32[144,128]{1,0:T(1,128)}', space=vmem, size = 0x12000, scoped, tag = 'internal scratch']
  %s0 = inlined_call_operand.hbm [shape: f32[1,2048], index: 0, kind: input, shape index: {}]
  %s1 = inlined_call_operand.hbm [shape: f32[1,2048], index: 1, kind: output, shape index: {}]
  %s2 = sld [smem:[#allocation0]]
  $region18: #{tpu_custom_call.1} parent=0
    _
  %s4 = ssub.s32 1, %s2
  %s5 = scalar_select 0, %s4, %s2
  $region1: #{tpu_custom_call.1} parent=0
    #allocation2 [shape = 'u8[8192]{0}', space=vmem, size = 0x2000, scoped, tag = 'input window, operand 0, single buffered']
    #allocation3 [shape = 's32[1]{0}', space=sflag, size = 0x4, scoped, tag = 'scoped memory for tpu_custom_call.1']
    #allocation4 [shape = 's32[1]{0}', space=sflag, size = 0x4, scoped, tag = 'scoped memory for tpu_custom_call.1']
    #allocation5 [shape = 'u8[8192]{0}', space=vmem, size = 0x2000, scoped, tag = 'output window, operand 0, single buffered']
    %6 = vsyncpa [#allocation3], 0
    %7 = vsyncpa [#allocation4], 0
    // Predicated region
    $region2: #{tpu_custom_call.1} parent=1 // pred_check
      _
    $region3: #{tpu_custom_call.1} parent=1 // pred_check_branch
      %9 = sbr.rel (0) target = $region5
    $region4: #{tpu_custom_call.1} parent=1 // pred_region
      %s11 = ssub.s32 256, 256
      %12 = vsyncadd [#allocation3], %s11
      %s14 = sshll.u32 [#allocation2], 4
      %s15 = int_to_ptr.vmem [resolvable:$true] %s14
      %17 = dma.hbm_to_vmem [thread:$0]  %s0, 256, %s15, [#allocation3]
    $region5: #{tpu_custom_call.1} parent=1 // pred_fallthru
      _
    // Predicated region
    $region6: #{tpu_custom_call.1} parent=1 // pred_check
      _
    $region7: #{tpu_custom_call.1} parent=1 // pred_check_branch
      %19 = sbr.rel (0) target = $region9
    $region8: #{tpu_custom_call.1} parent=1 // pred_region
      %20 = dma.done [#allocation3], 256
    $region9: #{tpu_custom_call.1} parent=1 // pred_fallthru
      _
    %v21 = vld [vmem:[#allocation2] sm:$0xff]
    %v22 = vld [vmem:[#allocation2 + $0x8] sm:$0xff]
    %v23 = vmul.f32 %v21, -0.5
    %v24 = vmul.f32 %v22, -0.5
    %25 = vst [vmem:[#allocation5] sm:$0xff] %v23
    %26 = vst [vmem:[#allocation5 + $0x8] sm:$0xff] %v24
    // Predicated region
    $region10: #{tpu_custom_call.1} parent=1 // pred_check
      _
    $region11: #{tpu_custom_call.1} parent=1 // pred_check_branch
      %28 = sbr.rel (0) target = $region13
    $region12: #{tpu_custom_call.1} parent=1 // pred_region
      %s30 = ssub.s32 256, 256
      %31 = vsyncadd [#allocation4], %s30
      %s33 = sshll.u32 [#allocation5], 4
      %s34 = int_to_ptr.vmem [resolvable:$true] %s33
      %36 = dma.vmem_to_hbm [thread:$0]  %s34, 256, %s1, [#allocation4]
    $region13: #{tpu_custom_call.1} parent=1 // pred_fallthru
      _
    // Predicated region
    $region14: #{tpu_custom_call.1} parent=1 // pred_check
      _
    $region15: #{tpu_custom_call.1} parent=1 // pred_check_branch
      %38 = sbr.rel (0) target = $region17
    $region16: #{tpu_custom_call.1} parent=1 // pred_region
      %39 = dma.done [#allocation4], 256
    $region17: #{tpu_custom_call.1} parent=1 // pred_fallthru
      _
    %40 = vsyncpa [#allocation3], 1
    %41 = vsyncpa [#allocation4], 1

</llo_original>
